<compile_context>
chip_gen: v6e
topology: v6e:2x2x1
jax: 0.10.0
libtpu: 0.0.40
codegen_flags: <defaults>
</compile_context>

<pallas_src>
import functools

import jax
import jax.numpy as jnp
from jax.experimental import pallas as pl
from jax.experimental.pallas import tpu as pltpu


_TR_MAX = 256            # max rows per tile (multiple of every sublane unit)
_TT_MAX = 8192           # absolute cap on time steps per tile
_TILE_BYTE_TARGET = 4 << 20   # ~4 MiB per in-flight input buffer


def _round_up(n, m):
    return ((n + m - 1) // m) * m


def _sublane_unit(itemsize):
    # dtype-native sublane packing: f32 -> 8, bf16 -> 16, int8/fp8 -> 32
    return {4: 8, 2: 16, 1: 32}.get(itemsize, 8)


def _pick_row_tile(rows, sub):
    if rows <= sub:
        return rows                      # block == full dim (allowed)
    tr = min(_TR_MAX, (rows // sub) * sub)
    # Guarantee >= 2 row tiles when possible so v7x's 2 TensorCores both work.
    if rows >= 2 * sub and pl.cdiv(rows, tr) < 2:
        tr = _round_up((rows + 1) // 2, sub)
    return tr


def _pick_time_tile(t, tr, itemsize):
    if t < 128:
        return t                         # block == full dim (allowed)
    tt = (_TILE_BYTE_TARGET // (tr * itemsize)) // 128 * 128
    tt = max(128, min(tt, _TT_MAX, _round_up(t, 128)))
    return tt


def _vmem_limit_bytes(tr, tt, itemsize):
    in_tile = tr * tt * itemsize
    f32_tile = tr * tt * 4
    need = 2 * in_tile          # double-buffered input
    need += 2 * f32_tile        # f32 upcast + x*x temporaries
    need += 4 * tr * 128 * 4    # accumulators / outputs / slack
    need = int(need * 1.3) + (2 << 20)
    # Floor at the usual scoped default, cap well under v7x's 64 MiB physical.
    return max(32 << 20, min(need, 48 << 20))


def _st_pool_kernel(x_ref, mean_ref, std_ref, s_acc, q_acc, *, t_true, tt, ragged):
    """One (tr, tt) tile of the (rows, T) input.

    x_ref    : (tr, tt) VMEM input tile
    mean_ref : (tr, 1)  output (resident across the T grid axis)
    std_ref  : (tr, 1)  output (resident across the T grid axis)
    s_acc    : (tr, 1)  f32 scratch, running Σx
    q_acc    : (tr, 1)  f32 scratch, running Σx²
    """
    tj = pl.program_id(1)

    @pl.when(tj == 0)
    def _():
        s_acc[...] = jnp.zeros_like(s_acc)
        q_acc[...] = jnp.zeros_like(q_acc)

    x = x_ref[...].astype(jnp.float32)
    if ragged:
        # Mask columns beyond the true T (OOB block contents are unspecified).
        col = jax.lax.broadcasted_iota(jnp.int32, (1, tt), 1) + tj * tt
        x = jnp.where(col < t_true, x, 0.0)

    s_acc[...] += jnp.sum(x, axis=-1, keepdims=True)
    q_acc[...] += jnp.sum(x * x, axis=-1, keepdims=True)

    @pl.when(tj == pl.num_programs(1) - 1)
    def _():
        s = s_acc[...]
        q = q_acc[...]
        t_f = float(t_true)
        mean = s * (1.0 / t_f)
        # Unbiased variance; clamp tiny negatives from f32 cancellation.
        var = (q - s * mean) / (t_f - 1.0)
        var = jnp.maximum(var, 0.0)
        mean_ref[...] = mean.astype(mean_ref.dtype)
        std_ref[...] = jnp.sqrt(var).astype(std_ref.dtype)


def st_pool(x):
    """Statistics pooling. x: (B, C, T) -> (B, 2*C) = cat([mean, std], -1)."""
    b, c, t = x.shape
    rows = b * c
    itemsize = jnp.dtype(x.dtype).itemsize

    # Flatten (B, C) onto the sublane axis; time stays on the lane axis.
    x2 = x.reshape(rows, t)

    sub = _sublane_unit(itemsize)
    tr = _pick_row_tile(rows, sub)
    tt = _pick_time_tile(t, tr, itemsize)
    grid = (pl.cdiv(rows, tr), pl.cdiv(t, tt))
    ragged = (t % tt) != 0

    kernel = functools.partial(_st_pool_kernel, t_true=t, tt=tt, ragged=ragged)

    mean_p, std_p = pl.pallas_call(
        kernel,
        out_shape=[
            jax.ShapeDtypeStruct((rows, 1), x.dtype),   # mean
            jax.ShapeDtypeStruct((rows, 1), x.dtype),   # std
        ],
        grid_spec=pltpu.PrefetchScalarGridSpec(
            num_scalar_prefetch=0,
            grid=grid,
            in_specs=[
                pl.BlockSpec((tr, tt), lambda i, j: (i, j)),
            ],
            out_specs=[
                # Same block index across the T axis -> accumulator-resident
                # output, written back once per row tile.
                pl.BlockSpec((tr, 1), lambda i, j: (i, 0)),
                pl.BlockSpec((tr, 1), lambda i, j: (i, 0)),
            ],
            scratch_shapes=[
                pltpu.VMEM((tr, 1), jnp.float32),   # running Σx
                pltpu.VMEM((tr, 1), jnp.float32),   # running Σx²
            ],
        ),
        compiler_params=pltpu.CompilerParams(
            # rows parallel (v7x dual-TC sharding), T reduction arbitrary & last.
            dimension_semantics=("parallel", "arbitrary"),
            vmem_limit_bytes=_vmem_limit_bytes(tr, tt, itemsize),
        ),
        cost_estimate=pl.CostEstimate(
            flops=4 * rows * t,
            transcendentals=rows,                       # one sqrt per row
            bytes_accessed=rows * t * itemsize + 2 * rows * itemsize,
        ),
    )(x2)

    mean = mean_p[:, 0].reshape(b, c)
    std = std_p[:, 0].reshape(b, c)
    return jnp.concatenate([mean, std], axis=-1)


if __name__ == "__main__":
    key = jax.random.PRNGKey(0)
    # Small shape consistent with the module: (batch=2, channels=4, time=16).
    x = jax.random.normal(key, (2, 4, 16), dtype=jnp.float32)

    out = jax.block_until_ready(st_pool(x))

    # Reference (plain JAX): torch.mean / torch.std(unbiased) / cat.
    ref_mean = jnp.mean(x, axis=2)
    ref_std = jnp.std(x, axis=2, ddof=1)
    ref = jnp.concatenate([ref_mean, ref_std], axis=-1)

    assert out.shape == (2, 8), out.shape
    assert jnp.allclose(out, ref, atol=1e-5, rtol=1e-5), jnp.max(jnp.abs(out - ref))

    print("KERNEL_OK")
</pallas_src>

<mosaic_0001>
module attributes {stable_mosaic.version = 11 : i64} {
  func.func @_st_pool_kernel(%arg0: i32, %arg1: i32, %arg2: memref<8x16xf32, #tpu.memory_space<vmem>>, %arg3: memref<8x1xf32, #tpu.memory_space<vmem>>, %arg4: memref<8x1xf32, #tpu.memory_space<vmem>>, %arg5: memref<8x1xf32, #tpu.memory_space<vmem>>, %arg6: memref<8x1xf32, #tpu.memory_space<vmem>>) attributes {dimension_semantics = [#tpu.dimension_semantics<parallel>, #tpu.dimension_semantics<arbitrary>], iteration_bounds = array<i64: 1, 1>, scalar_prefetch = 0 : i64, scratch_operands = 2 : i64, tpu.core_type = #tpu.core_type<tc>, window_params = [{transform_indices = @transform_0, window_bounds = array<i64: 8, 16>}, {transform_indices = @transform_1, window_bounds = array<i64: 8, 1>}, {transform_indices = @transform_2, window_bounds = array<i64: 8, 1>}]} {
    %c0_i32 = arith.constant 0 : i32
    %0 = arith.cmpi eq, %arg1, %c0_i32 : i32
    %1 = arith.extui %0 : i1 to i32
    %c0_i32_0 = arith.constant 0 : i32
    %2 = arith.cmpi ne, %1, %c0_i32_0 : i32
    scf.if %2 {
      %cst_13 = arith.constant 0.000000e+00 : f32
      %18 = vector.broadcast %cst_13 : f32 to vector<8x1xf32>
      %c0_14 = arith.constant 0 : index
      %c0_15 = arith.constant 0 : index
      %19 = vector.load %arg5[%c0_14, %c0_15] : memref<8x1xf32, #tpu.memory_space<vmem>>, vector<8x1xf32>
      tpu.vector_store %arg5[%c0_14, %c0_15], %18 {strides = array<i32>} : memref<8x1xf32, #tpu.memory_space<vmem>>, vector<8x1xf32>,
      %cst_16 = arith.constant 0.000000e+00 : f32
      %20 = vector.broadcast %cst_16 : f32 to vector<8x1xf32>
      %c0_17 = arith.constant 0 : index
      %c0_18 = arith.constant 0 : index
      %21 = vector.load %arg6[%c0_17, %c0_18] : memref<8x1xf32, #tpu.memory_space<vmem>>, vector<8x1xf32>
      tpu.vector_store %arg6[%c0_17, %c0_18], %20 {strides = array<i32>} : memref<8x1xf32, #tpu.memory_space<vmem>>, vector<8x1xf32>,
    } else {
    }
    %c0 = arith.constant 0 : index
    %c0_1 = arith.constant 0 : index
    %3 = vector.load %arg2[%c0, %c0_1] : memref<8x16xf32, #tpu.memory_space<vmem>>, vector<8x16xf32>
    %c0_2 = arith.constant 0 : index
    %c0_3 = arith.constant 0 : index
    %4 = vector.load %arg5[%c0_2, %c0_3] : memref<8x1xf32, #tpu.memory_space<vmem>>, vector<8x1xf32>
    %cst = arith.constant dense<0.000000e+00> : vector<8xf32>
    %5 = vector.multi_reduction <add>, %3, %cst [1] : vector<8x16xf32> to vector<8xf32>
    %6 = vector.shape_cast %5 : vector<8xf32> to vector<8x1xf32>
    %7 = arith.addf %4, %6 : vector<8x1xf32>
    %c0_4 = arith.constant 0 : index
    %c0_5 = arith.constant 0 : index
    %8 = vector.load %arg5[%c0_4, %c0_5] : memref<8x1xf32, #tpu.memory_space<vmem>>, vector<8x1xf32>
    tpu.vector_store %arg5[%c0_4, %c0_5], %7 {strides = array<i32>} : memref<8x1xf32, #tpu.memory_space<vmem>>, vector<8x1xf32>,
    %c0_6 = arith.constant 0 : index
    %c0_7 = arith.constant 0 : index
    %9 = vector.load %arg6[%c0_6, %c0_7] : memref<8x1xf32, #tpu.memory_space<vmem>>, vector<8x1xf32>
    %10 = arith.mulf %3, %3 : vector<8x16xf32>
    %cst_8 = arith.constant dense<0.000000e+00> : vector<8xf32>
    %11 = vector.multi_reduction <add>, %10, %cst_8 [1] : vector<8x16xf32> to vector<8xf32>
    %12 = vector.shape_cast %11 : vector<8xf32> to vector<8x1xf32>
    %13 = arith.addf %9, %12 : vector<8x1xf32>
    %c0_9 = arith.constant 0 : index
    %c0_10 = arith.constant 0 : index
    %14 = vector.load %arg6[%c0_9, %c0_10] : memref<8x1xf32, #tpu.memory_space<vmem>>, vector<8x1xf32>
    tpu.vector_store %arg6[%c0_9, %c0_10], %13 {strides = array<i32>} : memref<8x1xf32, #tpu.memory_space<vmem>>, vector<8x1xf32>,
    %c0_i32_11 = arith.constant 0 : i32
    %15 = arith.cmpi eq, %arg1, %c0_i32_11 : i32
    %16 = arith.extui %15 : i1 to i32
    %c0_i32_12 = arith.constant 0 : i32
    %17 = arith.cmpi ne, %16, %c0_i32_12 : i32
    scf.if %17 {
      %c0_13 = arith.constant 0 : index
      %c0_14 = arith.constant 0 : index
      %18 = vector.load %arg5[%c0_13, %c0_14] : memref<8x1xf32, #tpu.memory_space<vmem>>, vector<8x1xf32>
      %c0_15 = arith.constant 0 : index
      %c0_16 = arith.constant 0 : index
      %19 = vector.load %arg6[%c0_15, %c0_16] : memref<8x1xf32, #tpu.memory_space<vmem>>, vector<8x1xf32>
      %cst_17 = arith.constant 6.250000e-02 : f32
      %20 = vector.broadcast %cst_17 : f32 to vector<8x1xf32>
      %21 = arith.mulf %18, %20 : vector<8x1xf32>
      %22 = arith.mulf %18, %21 : vector<8x1xf32>
      %23 = arith.subf %19, %22 : vector<8x1xf32>
      %cst_18 = arith.constant 1.500000e+01 : f32
      %24 = vector.broadcast %cst_18 : f32 to vector<8x1xf32>
      %25 = arith.divf %23, %24 : vector<8x1xf32>
      %cst_19 = arith.constant 0.000000e+00 : f32
      %26 = vector.broadcast %cst_19 : f32 to vector<8x1xf32>
      %27 = arith.maximumf %25, %26 : vector<8x1xf32>
      %c0_20 = arith.constant 0 : index
      %c0_21 = arith.constant 0 : index
      %28 = vector.load %arg3[%c0_20, %c0_21] : memref<8x1xf32, #tpu.memory_space<vmem>>, vector<8x1xf32>
      tpu.vector_store %arg3[%c0_20, %c0_21], %21 {strides = array<i32>} : memref<8x1xf32, #tpu.memory_space<vmem>>, vector<8x1xf32>,
      %29 = math.sqrt %27 : vector<8x1xf32>
      %c0_22 = arith.constant 0 : index
      %c0_23 = arith.constant 0 : index
      %30 = vector.load %arg4[%c0_22, %c0_23] : memref<8x1xf32, #tpu.memory_space<vmem>>, vector<8x1xf32>
      tpu.vector_store %arg4[%c0_22, %c0_23], %29 {strides = array<i32>} : memref<8x1xf32, #tpu.memory_space<vmem>>, vector<8x1xf32>,
    } else {
    }
    return
  }
  func.func @transform_0(%arg0: i32, %arg1: i32) -> (i32, i32) {
    %c0_i32 = arith.constant 0 : i32
    return %arg0, %arg1 : i32, i32
  }
  func.func @transform_1(%arg0: i32, %arg1: i32) -> (i32, i32) {
    %c0_i32 = arith.constant 0 : i32
    %c0_i32_0 = arith.constant 0 : i32
    return %arg0, %c0_i32 : i32, i32
  }
  func.func @transform_2(%arg0: i32, %arg1: i32) -> (i32, i32) {
    %c0_i32 = arith.constant 0 : i32
    %c0_i32_0 = arith.constant 0 : i32
    return %arg0, %c0_i32 : i32, i32
  }
}

</mosaic_0001>

<llo_original>
// kernel: tpu_custom_call.1
$region0: #{tpu_custom_call.1}
  #allocation0 [shape = 'u32[]', space=smem, size = 0x4, offset = 0x4, fixed_abs, tag = 'smem constant byte address 0x4 - core index']
  #allocation1 [shape = 'u32[144,128]{1,0:T(1,128)}', space=vmem, size = 0x12000, scoped, tag = 'internal scratch']
  #allocation2 [shape = 'f32[8,1]{1,0:T(8,128)}', space=vmem, size = 0x1000, scoped, tag = 'scratch operand']
  #allocation3 [shape = 'f32[8,1]{1,0:T(8,128)}', space=vmem, size = 0x1000, scoped, tag = 'scratch operand']
  %s0 = inlined_call_operand.hbm [shape: f32[8,16], index: 0, kind: input, shape index: {}]
  %s1 = inlined_call_operand.vmem [shape: f32[8,1], index: 1, kind: output, shape index: {0}]
  %s2 = inlined_call_operand.vmem [shape: f32[8,1], index: 2, kind: output, shape index: {1}]
  %3 = xla_tuple %s1, %s2
  %s4 = sld [smem:[#allocation0]]
  $region34: #{tpu_custom_call.1} parent=0
    _
  %s6 = ssub.s32 1, %s4
  %s7 = scalar_select 0, %s6, %s4
  $region1: #{tpu_custom_call.1} parent=0
    #allocation4 [shape = 'u8[4096]{0}', space=vmem, size = 0x1000, scoped, tag = 'input window, operand 0, single buffered']
    #allocation5 [shape = 's32[1]{0}', space=sflag, size = 0x4, scoped, tag = 'scoped memory for tpu_custom_call.1']
    %8 = vsyncpa [#allocation5], 0
    // Predicated region
    $region2: #{tpu_custom_call.1} parent=1 // pred_check
      _
    $region3: #{tpu_custom_call.1} parent=1 // pred_check_branch
      %10 = sbr.rel (0) target = $region5
    $region4: #{tpu_custom_call.1} parent=1 // pred_region
      %s12 = ssub.s32 128, 128
      %13 = vsyncadd [#allocation5], %s12
      %s15 = sshll.u32 [#allocation4], 4
      %s16 = int_to_ptr.vmem [resolvable:$true] %s15
      %18 = dma.hbm_to_vmem [thread:$0]  %s0, 128, %s16, [#allocation5]
    $region5: #{tpu_custom_call.1} parent=1 // pred_fallthru
      _
    // Predicated region
    $region6: #{tpu_custom_call.1} parent=1 // pred_check
      _
    $region7: #{tpu_custom_call.1} parent=1 // pred_check_branch
      %20 = sbr.rel (0) target = $region9
    $region8: #{tpu_custom_call.1} parent=1 // pred_region
      %21 = dma.done [#allocation5], 128
    $region9: #{tpu_custom_call.1} parent=1 // pred_fallthru
      _
    %p22 = scmp.eq.s32.totalorder 0, 0
    // Predicated region
    $region10: #{tpu_custom_call.1} parent=1 // pred_check
      %p23 = pneg %p22
    $region11: #{tpu_custom_call.1} parent=1 // pred_check_branch
      %25 = sbr.rel (%p23) target = $region13
    $region12: #{tpu_custom_call.1} parent=1 // pred_region
      %vm26 = vcmask 7168
      %27 = vst.msk [vmem:[#allocation2] sm:$0xff] %vm26, 0.0
      %28 = vst.msk [vmem:[#allocation3] sm:$0xff] %vm26, 0.0
    $region13: #{tpu_custom_call.1} parent=1 // pred_fallthru
      _
    %v29 = vld [vmem:[#allocation4] sm:$0xff]
    %v30 = vld [vmem:[#allocation2] sm:$0xff]
    %vm31 = vcmask 130048
    %v32 = vsel %vm31, %v29, 0.0
    %33 = vadd.xlane.f32.xlu0 %v32
    %v34 = vpop.xlane.xlu0 %33
    %v35 = vadd.f32 %v30, %v34
    %vm36 = vcmask 7168
    %37 = vst.msk [vmem:[#allocation2] sm:$0xff] %vm36, %v35
    %v38 = vld [vmem:[#allocation3] sm:$0xff]
    %v39 = vmul.f32 %v29, %v29
    %v40 = vsel %vm31, %v39, 0.0
    %41 = vadd.xlane.f32.xlu0 %v40
    %v42 = vpop.xlane.xlu0 %41
    %v43 = vadd.f32 %v38, %v42
    %44 = vst.msk [vmem:[#allocation3] sm:$0xff] %vm36, %v43
    // Predicated region
    $region14: #{tpu_custom_call.1} parent=1 // pred_check
      %p45 = pneg %p22
    $region15: #{tpu_custom_call.1} parent=1 // pred_check_branch
      %47 = sbr.rel (%p45) target = $region17
    $region16: #{tpu_custom_call.1} parent=1 // pred_region
      %v48 = vld [vmem:[#allocation2] sm:$0xff]
      %v49 = vld [vmem:[#allocation3] sm:$0xff]
      %v50 = vmul.f32 %v48, 0.0625
      %v51 = vmul.f32 %v48, %v50
      %v52 = vsub.f32 %v49, %v51
      %v53 = vrcp.pop 15.0
      %v54 = vmul.f32 %v52, %v53
      %v55 = vmax.f32 %v54, 0.0
      %56 = vst.msk [vmem:[%s1] sm:$0xff] %vm36, %v50
      %v57 = vrsqrt.pop %v55
      %v58 = vmul.f32 %v55, %v57
      %vm59 = vcmp.eq.f32.partialorder %v55, inf
      %v60 = vsel %vm59, %v55, %v58
      %vm61 = vcmp.eq.f32.partialorder %v55, 0.0
      %v62 = vand.u32 %v55, 2147483648
      %v63 = vsel %vm61, %v62, %v60
      %64 = vst.msk [vmem:[%s2] sm:$0xff] %vm36, %v63
    $region17: #{tpu_custom_call.1} parent=1 // pred_fallthru
      _
    // Predicated region
    $region18: #{tpu_custom_call.1} parent=1 // pred_check
      _
    $region19: #{tpu_custom_call.1} parent=1 // pred_check_branch
      %66 = sbr.rel (0) target = $region21
    $region20: #{tpu_custom_call.1} parent=1 // pred_region
      _
    $region21: #{tpu_custom_call.1} parent=1 // pred_fallthru
      _
    // Predicated region
    $region22: #{tpu_custom_call.1} parent=1 // pred_check
      _
    $region23: #{tpu_custom_call.1} parent=1 // pred_check_branch
      %68 = sbr.rel (0) target = $region25
    $region24: #{tpu_custom_call.1} parent=1 // pred_region
      _
    $region25: #{tpu_custom_call.1} parent=1 // pred_fallthru
      _
    // Predicated region
    $region26: #{tpu_custom_call.1} parent=1 // pred_check
      _
    $region27: #{tpu_custom_call.1} parent=1 // pred_check_branch
      %70 = sbr.rel (0) target = $region29
    $region28: #{tpu_custom_call.1} parent=1 // pred_region
      _
    $region29: #{tpu_custom_call.1} parent=1 // pred_fallthru
      _
    // Predicated region
    $region30: #{tpu_custom_call.1} parent=1 // pred_check
      _
    $region31: #{tpu_custom_call.1} parent=1 // pred_check_branch
      %72 = sbr.rel (0) target = $region33
    $region32: #{tpu_custom_call.1} parent=1 // pred_region
      _
    $region33: #{tpu_custom_call.1} parent=1 // pred_fallthru
      _
    %73 = vsyncpa [#allocation5], 1

</llo_original>
